<compile_context>
chip_gen: v5e
topology: v5e:2x2
jax: 0.10.0
libtpu: 0.0.40
codegen_flags: <defaults>
</compile_context>

<pallas_src>
import functools

import jax
import jax.numpy as jnp
from jax.experimental import pallas as pl
from jax.experimental.pallas import tpu as pltpu

EPS = 1e-7


def _round_up(x, m):
    return ((x + m - 1) // m) * m


@functools.lru_cache(maxsize=1)
def _tpu_vmem_info():
    """(physical VMEM bytes per core, is_v7x) — conservative defaults on failure."""
    vmem = 128 << 20
    is_v7 = False
    try:
        info = pltpu.get_tpu_info()
        vmem = int(getattr(info, "vmem_capacity_bytes", vmem))
    except Exception:
        pass
    try:
        kind = jax.devices()[0].device_kind.lower()
        is_v7 = "v7" in kind
    except Exception:
        pass
    return vmem, is_v7


# ------------------------------ kernels ------------------------------------ #
def _rot_full_kernel(x_ref, r_ref, o_ref):
    """out = nan_to_num(x @ R), full reduction dim resident."""
    y = jnp.dot(x_ref[...], r_ref[...], preferred_element_type=jnp.float32)
    o_ref[...] = jnp.nan_to_num(y).astype(o_ref.dtype)


def _rot_tiled_kernel(x_ref, r_ref, o_ref):
    """K/N-tiled out = nan_to_num(x @ R); accumulate directly in the f32 o_ref.

    The output BlockSpec returns the same (i, j) block for every k, so o_ref is
    resident across the reduction axis (no separate acc scratch needed).
    """
    @pl.when(pl.program_id(2) == 0)
    def _():
        o_ref[...] = jnp.zeros_like(o_ref)

    o_ref[...] += jnp.dot(x_ref[...], r_ref[...],
                          preferred_element_type=jnp.float32)

    @pl.when(pl.program_id(2) == pl.num_programs(2) - 1)
    def _():
        o_ref[...] = jnp.nan_to_num(o_ref[...])


# ------------------------------ wrapper ------------------------------------ #
def rotate_rows(x, R, *, tm=None, use_bf16=False, vmem_budget_bytes=None):
    """x: (N, d), R: (d, d_out)  ->  nan_to_num(x @ R) as float32, shape (N, d_out)."""
    n, d = x.shape
    dk, d_out = R.shape
    assert dk == d

    vmem_bytes, is_v7 = _tpu_vmem_info()
    budget = (vmem_budget_bytes if vmem_budget_bytes is not None
              else int(vmem_bytes * 0.7))

    # Lane-dense output: pad only R's output columns up to a multiple of 128 so
    # every store is an unmasked full-lane vst; extra columns are sliced off in
    # the wrapper. X is never padded (its last dim equals the full array dim).
    d_pad = _round_up(d_out, 128)
    if d_pad != d_out:
        R = jnp.pad(R, ((0, 0), (0, d_pad - d_out)))

    if use_bf16:
        x_in = x.astype(jnp.bfloat16)
        R_in = R.astype(jnp.bfloat16)
    else:
        x_in = x.astype(jnp.float32)
        R_in = R.astype(jnp.float32)
    elt = jnp.dtype(x_in.dtype).itemsize

    # Row tile: big on 128 MiB parts (v5e/v6e), 512 on v7x. On v7x additionally
    # split the rows so grid_m >= 2 and the "parallel" axis shards across both
    # TensorCores.
    if tm is None:
        tm = 1024 if vmem_bytes >= (96 << 20) else 512
    tm_eff = min(tm, _round_up(max(n, 1), 8))
    if is_v7 and n >= 16:
        tm_eff = min(tm_eff, _round_up(pl.cdiv(n, 2), 8))

    def full_bytes(tm_):
        # double-buffered X + double-buffered out + R (counted double-buffered).
        # TODO(synk): single-buffer the constant R via pipeline_mode=pl.Buffered(1)
        # once confirmed supported by the top-level pallas_call pipeliner.
        return elt * 2 * tm_ * d + 4 * 2 * tm_ * d_pad + elt * 2 * d * d_pad

    use_tiled = (d % 128 == 0) and full_bytes(tm_eff) > budget

    cost = pl.CostEstimate(
        flops=2 * n * d * d_pad,
        transcendentals=0,
        bytes_accessed=elt * (n * d + d * d_pad) + 4 * n * d_pad)

    vmem_cap = max(vmem_bytes - (8 << 20), 32 << 20)

    if not use_tiled:
        # Forced full-d path (d not a multiple of 128): shrink the row tile if
        # needed instead of tiling a non-aligned reduction dim.
        while full_bytes(tm_eff) > budget and tm_eff > 64:
            tm_eff = max(64, _round_up(tm_eff // 2, 8))
        grid_m = pl.cdiv(n, tm_eff)
        need = full_bytes(tm_eff)
        vmem_limit = int(min(vmem_cap, max(2 * need, 32 << 20)))

        out = pl.pallas_call(
            _rot_full_kernel,
            out_shape=jax.ShapeDtypeStruct((n, d_pad), jnp.float32),
            grid=(grid_m,),
            in_specs=[
                pl.BlockSpec((tm_eff, d), lambda i: (i, 0)),   # row slab of X
                pl.BlockSpec((d, d_pad), lambda i: (0, 0)),    # R fully resident
            ],
            out_specs=pl.BlockSpec((tm_eff, d_pad), lambda i: (i, 0)),
            compiler_params=pltpu.CompilerParams(
                dimension_semantics=("parallel",),
                vmem_limit_bytes=vmem_limit),
            cost_estimate=cost,
        )(x_in, R_in)
    else:
        # K-tiled reduction (axis last, "arbitrary"); N kept as wide as fits so
        # each X row slab is read exactly once per row tile.
        tk = 256 if d % 256 == 0 else 128

        def tiled_bytes(tn_):
            return (elt * 2 * tm_eff * tk + elt * 2 * tk * tn_
                    + 4 * 2 * tm_eff * tn_)

        tn = 128
        for cand in (d_pad, 2048, 1024, 512, 256, 128):
            if cand <= d_pad and d_pad % cand == 0 and tiled_bytes(cand) <= budget:
                tn = cand
                break
        grid_m = pl.cdiv(n, tm_eff)
        need = tiled_bytes(tn)
        vmem_limit = int(min(vmem_cap, max(2 * need, 32 << 20)))

        out = pl.pallas_call(
            _rot_tiled_kernel,
            out_shape=jax.ShapeDtypeStruct((n, d_pad), jnp.float32),
            grid=(grid_m, d_pad // tn, d // tk),
            in_specs=[
                pl.BlockSpec((tm_eff, tk), lambda i, j, k: (i, k)),
                pl.BlockSpec((tk, tn), lambda i, j, k: (k, j)),
            ],
            out_specs=pl.BlockSpec((tm_eff, tn), lambda i, j, k: (i, j)),
            compiler_params=pltpu.CompilerParams(
                dimension_semantics=("parallel", "parallel", "arbitrary"),
                vmem_limit_bytes=vmem_limit),
            cost_estimate=cost,
        )(x_in, R_in)

    if d_pad != d_out:
        out = out[:, :d_out]
    return out


# --------------------- quaternion -> equivalent 4x4 ------------------------ #
def _pvq_as_matrix(p, q):
    """Return M (4,4) such that hamilton(hamilton(p, v), q) == v_row @ M."""
    pw, px, py, pz = p[0], p[1], p[2], p[3]
    qw, qx, qy, qz = q[0], q[1], q[2], q[3]
    # Left-multiplication matrix of p (column-vector convention): p (.) v = L @ v
    L = jnp.array([[pw, -px, -py, -pz],
                   [px,  pw, -pz,  py],
                   [py,  pz,  pw, -px],
                   [pz, -py,  px,  pw]], dtype=jnp.float32)
    # Right-multiplication matrix of q: v (.) q = Rm @ v
    Rm = jnp.array([[qw, -qx, -qy, -qz],
                    [qx,  qw,  qz, -qy],
                    [qy, -qz,  qw,  qx],
                    [qz,  qy, -qx,  qw]], dtype=jnp.float32)
    # column:  out = Rm @ L @ v   ->   row:  out_row = v_row @ (Rm @ L).T
    return (Rm @ L).T


# ------------------------------- module ------------------------------------ #
class TangentSpaceRotation:
    """JAX/Pallas port of draftPY.WuBuNesting.TangentSpaceRotation (forward only)."""

    def __init__(self, dim, rotation_type="so_n", key=None, use_bf16=False):
        self.dim = dim
        self.rotation_type = rotation_type
        self.use_bf16 = use_bf16
        key = jax.random.PRNGKey(0) if key is None else key
        if rotation_type == "so_n":
            # geoopt OrthogonalMatrix(dim, dim, triv=expm): R = expm(skew(W)).
            # Parameter setup stays in plain JAX (glue); the matmul is the kernel.
            w = 0.1 * jax.random.normal(key, (dim, dim), dtype=jnp.float32)
            skew = w - w.T
            self.R = jax.scipy.linalg.expm(skew).astype(jnp.float32)
        elif rotation_type == "quat":
            if dim != 4:
                raise ValueError("Quaternion rotation requires dim=4.")
            kp, kq = jax.random.split(key)
            self.quat_params_p = 0.01 * jax.random.normal(kp, (4,), dtype=jnp.float32)
            self.quat_params_q = 0.01 * jax.random.normal(kq, (4,), dtype=jnp.float32)
        else:
            raise ValueError(f"Unsupported rotation type: {rotation_type}")
        # Effective row-rotation matrix (and lane-packed variant) is cached at
        # construction time; call refresh_operator() after a parameter update.
        self.refresh_operator()

    def _get_rotation_operator(self):
        if self.rotation_type == "so_n":
            return self.R
        # Sphere.projx (normalize) followed by the module's extra /(norm + EPS)
        p = self.quat_params_p / jnp.maximum(jnp.linalg.norm(self.quat_params_p), EPS)
        p = p / (jnp.linalg.norm(p) + EPS)
        q = self.quat_params_q / jnp.maximum(jnp.linalg.norm(self.quat_params_q), EPS)
        q = q / (jnp.linalg.norm(q) + EPS)
        return p, q

    def refresh_operator(self):
        if self.rotation_type == "so_n":
            R_eff = self.R
        else:
            p, q = self._get_rotation_operator()
            R_eff = _pvq_as_matrix(p, q)
        self._R_eff = R_eff
        dim = self.dim
        if dim < 128 and 128 % dim == 0:
            # Lane packing: r logical rows per 128-lane physical row, rotated by
            # kron(I_r, R) — built once here, not per forward call.
            self._pack_r = 128 // dim
            self._R_packed = jnp.kron(
                jnp.eye(self._pack_r, dtype=jnp.float32), R_eff).astype(jnp.float32)
        else:
            self._pack_r = 1
            self._R_packed = None

    def __call__(self, v_main, v_boundaries_stacked, v_descriptor):
        batch_size, num_points, dim = v_boundaries_stacked.shape
        v_descriptor = v_descriptor.reshape(1, dim)

        n_main = v_main.shape[0]
        n_bnd = batch_size * num_points
        n_rows = n_main + n_bnd + 1

        parts = [v_main.reshape(-1, dim),
                 v_boundaries_stacked.reshape(-1, dim),
                 v_descriptor]

        if self._pack_r > 1:
            r = self._pack_r
            n_pad_rows = _round_up(n_rows, r)
            if n_pad_rows != n_rows:
                # Fused into the concat we need anyway — no extra HBM pass.
                parts.append(jnp.zeros((n_pad_rows - n_rows, dim), v_main.dtype))
            x = jnp.concatenate(parts, axis=0)
            x_packed = x.reshape(n_pad_rows // r, r * dim)      # free reshape
            out = rotate_rows(x_packed, self._R_packed, use_bf16=self.use_bf16)
            out = out.reshape(n_pad_rows, dim)[:n_rows]
        else:
            x = jnp.concatenate(parts, axis=0)
            out = rotate_rows(x, self._R_eff, use_bf16=self.use_bf16)

        v_main_rot = out[:n_main]
        v_bnd_rot = out[n_main:n_main + n_bnd].reshape(batch_size, num_points, dim)
        v_desc_rot = out[n_main + n_bnd:]
        return v_main_rot, v_bnd_rot, v_desc_rot


# ----------------------------- reference (JAX) ----------------------------- #
def _hamilton_ref(q1, q2):
    w1, x1, y1, z1 = q1[..., 0], q1[..., 1], q1[..., 2], q1[..., 3]
    w2, x2, y2, z2 = q2[..., 0], q2[..., 1], q2[..., 2], q2[..., 3]
    w = w1 * w2 - x1 * x2 - y1 * y2 - z1 * z2
    x = w1 * x2 + x1 * w2 + y1 * z2 - z1 * y2
    y = w1 * y2 - x1 * z2 + y1 * w2 + z1 * x2
    z = w1 * z2 + x1 * y2 - y1 * x2 + z1 * w2
    return jnp.stack([w, x, y, z], axis=-1)


if __name__ == "__main__":
    key = jax.random.PRNGKey(0)
    k1, k2, k3, k4 = jax.random.split(key, 4)
    HI = jax.lax.Precision.HIGHEST

    # ---- SO(n) rotation test (small dim -> lane-packed path) ----
    B, P, DIM = 2, 5, 8
    v_main = jax.random.normal(k1, (B, DIM), dtype=jnp.float32)
    v_bnd = jax.random.normal(k2, (B, P, DIM), dtype=jnp.float32)
    v_desc = jax.random.normal(k3, (DIM,), dtype=jnp.float32)

    rot = TangentSpaceRotation(DIM, "so_n", key=k4)
    m_r, b_r, d_r = rot(v_main, v_bnd, v_desc)
    jax.block_until_ready((m_r, b_r, d_r))

    assert m_r.shape == (B, DIM) and b_r.shape == (B, P, DIM) and d_r.shape == (1, DIM)
    assert jnp.allclose(m_r, jnp.dot(v_main, rot.R, precision=HI), atol=1e-4)
    assert jnp.allclose(b_r.reshape(-1, DIM),
                        jnp.dot(v_bnd.reshape(-1, DIM), rot.R, precision=HI), atol=1e-4)
    assert jnp.allclose(d_r, jnp.dot(v_desc.reshape(1, DIM), rot.R, precision=HI), atol=1e-4)

    # ---- quaternion (SO(4) via pvq) rotation test ----
    v_main4 = jax.random.normal(k1, (B, 4), dtype=jnp.float32)
    v_bnd4 = jax.random.normal(k2, (B, P, 4), dtype=jnp.float32)
    v_desc4 = jax.random.normal(k3, (4,), dtype=jnp.float32)

    rot4 = TangentSpaceRotation(4, "quat", key=k4)
    m4, b4, d4 = rot4(v_main4, v_bnd4, v_desc4)
    jax.block_until_ready((m4, b4, d4))

    p, q = rot4._get_rotation_operator()
    v_flat = jnp.concatenate(
        [v_main4, v_bnd4.reshape(-1, 4), v_desc4.reshape(1, 4)], axis=0)
    ref_flat = _hamilton_ref(
        _hamilton_ref(jnp.broadcast_to(p, v_flat.shape), v_flat),
        jnp.broadcast_to(q, v_flat.shape))
    got_flat = jnp.concatenate([m4, b4.reshape(-1, 4), d4], axis=0)
    assert m4.shape == (B, 4) and b4.shape == (B, P, 4) and d4.shape == (1, 4)
    assert jnp.allclose(got_flat, ref_flat, atol=1e-4)

    # ---- medium dim: full-resident kernel path ----
    Dm = 256
    xm = jax.random.normal(k3, (100, Dm), dtype=jnp.float32)
    Rm = jax.random.normal(k4, (Dm, Dm), dtype=jnp.float32) / 16.0
    got_m = rotate_rows(xm, Rm)
    jax.block_until_ready(got_m)
    ref_m = jnp.dot(xm, Rm, precision=HI)
    assert got_m.shape == ref_m.shape
    assert jnp.allclose(got_m, ref_m, rtol=1e-3, atol=1e-2)

    # ---- non-lane-aligned dim: R-column padding (lane-dense output) path ----
    Dw = 200
    xw = jax.random.normal(k2, (50, Dw), dtype=jnp.float32)
    Rw = jax.random.normal(k1, (Dw, Dw), dtype=jnp.float32) / 16.0
    got_w = rotate_rows(xw, Rw)
    jax.block_until_ready(got_w)
    ref_w = jnp.dot(xw, Rw, precision=HI)
    assert got_w.shape == ref_w.shape
    assert jnp.allclose(got_w, ref_w, rtol=1e-3, atol=1e-2)

    # ---- large dim, default budget: now stays on the full-resident path ----
    Db = 1024
    xb = jax.random.normal(k1, (300, Db), dtype=jnp.float32)
    Rb = jax.random.normal(k2, (Db, Db), dtype=jnp.float32) / 32.0
    got_b = rotate_rows(xb, Rb)
    jax.block_until_ready(got_b)
    ref_b = jnp.dot(xb, Rb, precision=HI)
    assert got_b.shape == ref_b.shape
    assert jnp.allclose(got_b, ref_b, rtol=1e-3, atol=1e-2)

    # ---- K/N-tiled accumulate-into-output path (forced via a tiny budget) ----
    got_t = rotate_rows(xb, Rb, vmem_budget_bytes=2 << 20)
    jax.block_until_ready(got_t)
    assert got_t.shape == ref_b.shape
    assert jnp.allclose(got_t, ref_b, rtol=1e-3, atol=1e-2)

    print("KERNEL_OK")
</pallas_src>

<mosaic_0001>
module attributes {stable_mosaic.version = 11 : i64} {
  func.func @_rot_full_kernel(%arg0: i32, %arg1: memref<8x128xf32, #tpu.memory_space<vmem>>, %arg2: memref<128x128xf32, #tpu.memory_space<vmem>>, %arg3: memref<8x128xf32, #tpu.memory_space<vmem>>) attributes {dimension_semantics = [#tpu.dimension_semantics<parallel>], iteration_bounds = array<i64: 1>, scalar_prefetch = 0 : i64, scratch_operands = 0 : i64, tpu.core_type = #tpu.core_type<tc>, window_params = [{transform_indices = @transform_0, window_bounds = array<i64: 8, 128>}, {pipeline_mode = #tpu.pipeline_mode<synchronous>, transform_indices = @transform_1, window_bounds = array<i64: 128, 128>}, {transform_indices = @transform_2, window_bounds = array<i64: 8, 128>}]} {
    %c0 = arith.constant 0 : index
    %c0_0 = arith.constant 0 : index
    %0 = vector.load %arg1[%c0, %c0_0] : memref<8x128xf32, #tpu.memory_space<vmem>>, vector<8x128xf32>
    %c0_1 = arith.constant 0 : index
    %c0_2 = arith.constant 0 : index
    %1 = vector.load %arg2[%c0_1, %c0_2] : memref<128x128xf32, #tpu.memory_space<vmem>>, vector<128x128xf32>
    %cst = arith.constant dense<0.000000e+00> : vector<8x128xf32>
    %2 = tpu.matmul %0, %1, %cst {dimension_numbers = #tpu.dot_dimension_numbers<[1], [0], [0], [1], [0, 0, 1, 1], [], []>} : vector<8x128xf32>, vector<128x128xf32>, vector<8x128xf32> -> vector<8x128xf32>
    %3 = arith.cmpf one, %2, %2 : vector<8x128xf32>
    %cst_3 = arith.constant 0.000000e+00 : f32
    %4 = vector.broadcast %cst_3 : f32 to vector<8x128xf32>
    %5 = arith.select %3, %4, %2 : vector<8x128xi1>, vector<8x128xf32>
    %cst_4 = arith.constant 0x7F800000 : f32
    %6 = vector.broadcast %cst_4 : f32 to vector<8x128xf32>
    %7 = arith.cmpf oeq, %5, %6 : vector<8x128xf32>
    %cst_5 = arith.constant 3.40282347E+38 : f32
    %8 = vector.broadcast %cst_5 : f32 to vector<8x128xf32>
    %9 = arith.select %7, %8, %5 : vector<8x128xi1>, vector<8x128xf32>
    %cst_6 = arith.constant 0xFF800000 : f32
    %10 = vector.broadcast %cst_6 : f32 to vector<8x128xf32>
    %11 = arith.cmpf oeq, %9, %10 : vector<8x128xf32>
    %cst_7 = arith.constant -3.40282347E+38 : f32
    %12 = vector.broadcast %cst_7 : f32 to vector<8x128xf32>
    %13 = arith.select %11, %12, %9 : vector<8x128xi1>, vector<8x128xf32>
    %c0_8 = arith.constant 0 : index
    %c0_9 = arith.constant 0 : index
    %14 = vector.load %arg3[%c0_8, %c0_9] : memref<8x128xf32, #tpu.memory_space<vmem>>, vector<8x128xf32>
    tpu.vector_store %arg3[%c0_8, %c0_9], %13 {strides = array<i32>} : memref<8x128xf32, #tpu.memory_space<vmem>>, vector<8x128xf32>,
    return
  }
  func.func @transform_0(%arg0: i32) -> (i32, i32) {
    %c0_i32 = arith.constant 0 : i32
    %c0_i32_0 = arith.constant 0 : i32
    return %arg0, %c0_i32 : i32, i32
  }
  func.func @transform_1(%arg0: i32) -> (i32, i32) {
    %c0_i32 = arith.constant 0 : i32
    %c0_i32_0 = arith.constant 0 : i32
    %c0_i32_1 = arith.constant 0 : i32
    return %c0_i32, %c0_i32_0 : i32, i32
  }
  func.func @transform_2(%arg0: i32) -> (i32, i32) {
    %c0_i32 = arith.constant 0 : i32
    %c0_i32_0 = arith.constant 0 : i32
    return %arg0, %c0_i32 : i32, i32
  }
}

</mosaic_0001>

<llo_original>
// kernel: tpu_custom_call.1
$region0: #{tpu_custom_call.1}
  #allocation0 [shape = 'u32[]', space=smem, size = 0x4, offset = 0x4, fixed_abs, tag = 'smem constant byte address 0x4 - core index']
  #allocation1 [shape = 'u32[72,128]{1,0:T(1,128)}', space=vmem, size = 0x9000, scoped, tag = 'internal scratch']
  %s0 = inlined_call_operand.hbm [shape: f32[1,128], index: 0, kind: input, shape index: {}]
  %s1 = inlined_call_operand.hbm [shape: f32[128,128], index: 1, kind: input, shape index: {}]
  %s2 = inlined_call_operand.hbm [shape: f32[1,128], index: 2, kind: output, shape index: {}]
  %s3 = sld [smem:[#allocation0]]
  $region26: #{tpu_custom_call.1} parent=0
    _
  %s5 = ssub.s32 1, %s3
  %s6 = scalar_select 0, %s5, %s3
  $region1: #{tpu_custom_call.1} parent=0
    #allocation2 [shape = 'u8[4096]{0}', space=vmem, size = 0x1000, scoped, tag = 'input window, operand 0, single buffered']
    #allocation3 [shape = 's32[1]{0}', space=sflag, size = 0x4, scoped, tag = 'scoped memory for tpu_custom_call.1']
    #allocation4 [shape = 's32[1]{0}', space=sflag, size = 0x4, scoped, tag = 'scoped memory for tpu_custom_call.1']
    #allocation5 [shape = 'u8[65536]{0}', space=vmem, size = 0x10000, scoped, tag = 'input window, operand 1, single buffered']
    #allocation6 [shape = 's32[1]{0}', space=sflag, size = 0x4, scoped, tag = 'scoped memory for tpu_custom_call.1']
    #allocation7 [shape = 'u8[4096]{0}', space=vmem, size = 0x1000, scoped, tag = 'output window, operand 0, single buffered']
    %7 = vsyncpa [#allocation3], 0
    %8 = vsyncpa [#allocation6], 0
    %9 = vsyncpa [#allocation4], 0
    // Predicated region
    $region2: #{tpu_custom_call.1} parent=1 // pred_check
      _
    $region3: #{tpu_custom_call.1} parent=1 // pred_check_branch
      %11 = sbr.rel (0) target = $region5
    $region4: #{tpu_custom_call.1} parent=1 // pred_region
      %13 = vsyncadd [#allocation3], 112
      %s14 = sshll.u32 %s0, 4
      %s15 = int_to_ptr.hbm [resolvable:$true] %s14
      %s16 = sshll.u32 [#allocation2], 4
      %s17 = int_to_ptr.vmem [resolvable:$true] %s16
      %22 = dma.hbm_to_vmem [thread:$0]  %s15, 16, %s17, [#allocation3], 16, 16, 1
    $region5: #{tpu_custom_call.1} parent=1 // pred_fallthru
      _
    // Predicated region
    $region6: #{tpu_custom_call.1} parent=1 // pred_check
      _
    $region7: #{tpu_custom_call.1} parent=1 // pred_check_branch
      %24 = sbr.rel (0) target = $region9
    $region8: #{tpu_custom_call.1} parent=1 // pred_region
      %26 = vsyncadd [#allocation6], 0
      %s27 = sshll.u32 %s1, 4
      %s28 = int_to_ptr.hbm [resolvable:$true] %s27
      %s29 = sshll.u32 [#allocation5], 4
      %s30 = int_to_ptr.vmem [resolvable:$true] %s29
      %35 = dma.hbm_to_vmem [thread:$0]  %s28, 2048, %s30, [#allocation6], 128, 128, 8
    $region9: #{tpu_custom_call.1} parent=1 // pred_fallthru
      _
    // Predicated region
    $region10: #{tpu_custom_call.1} parent=1 // pred_check
      _
    $region11: #{tpu_custom_call.1} parent=1 // pred_check_branch
      %37 = sbr.rel (0) target = $region13
    $region12: #{tpu_custom_call.1} parent=1 // pred_region
      %39 = dma.done [#allocation3], 128
    $region13: #{tpu_custom_call.1} parent=1 // pred_fallthru
      _
    // Predicated region
    $region14: #{tpu_custom_call.1} parent=1 // pred_check
      _
    $region15: #{tpu_custom_call.1} parent=1 // pred_check_branch
      %41 = sbr.rel (0) target = $region17
    $region16: #{tpu_custom_call.1} parent=1 // pred_region
      %43 = dma.done [#allocation6], 2048
    $region17: #{tpu_custom_call.1} parent=1 // pred_fallthru
      _
    %v44 = vld [vmem:[#allocation2] sm:$0xff]
    %v45 = vld [vmem:[#allocation5] sm:$0xff]
    %v46 = vld [vmem:[#allocation5 + $0x8] sm:$0xff]
    %v47 = vld [vmem:[#allocation5 + $0x10] sm:$0xff]
    %v48 = vld [vmem:[#allocation5 + $0x18] sm:$0xff]
    %v49 = vld [vmem:[#allocation5 + $0x20] sm:$0xff]
    %v50 = vld [vmem:[#allocation5 + $0x28] sm:$0xff]
    %v51 = vld [vmem:[#allocation5 + $0x30] sm:$0xff]
    %v52 = vld [vmem:[#allocation5 + $0x38] sm:$0xff]
    %v53 = vld [vmem:[#allocation5 + $0x40] sm:$0xff]
    %v54 = vld [vmem:[#allocation5 + $0x48] sm:$0xff]
    %v55 = vld [vmem:[#allocation5 + $0x50] sm:$0xff]
    %v56 = vld [vmem:[#allocation5 + $0x58] sm:$0xff]
    %v57 = vld [vmem:[#allocation5 + $0x60] sm:$0xff]
    %v58 = vld [vmem:[#allocation5 + $0x68] sm:$0xff]
    %v59 = vld [vmem:[#allocation5 + $0x70] sm:$0xff]
    %v60 = vld [vmem:[#allocation5 + $0x78] sm:$0xff]
    %61 = vmatpush.msra.mxu0 %v60
    %62 = vmatpush.msra.mxu0 %v59
    %63 = vmatpush.msra.mxu0 %v58
    %64 = vmatpush.msra.mxu0 %v57
    %65 = vmatpush.msra.mxu0 %v56
    %66 = vmatpush.msra.mxu0 %v55
    %67 = vmatpush.msra.mxu0 %v54
    %68 = vmatpush.msra.mxu0 %v53
    %69 = vmatpush.msra.mxu0 %v52
    %70 = vmatpush.msra.mxu0 %v51
    %71 = vmatpush.msra.mxu0 %v50
    %72 = vmatpush.msra.mxu0 %v49
    %73 = vmatpush.msra.mxu0 %v48
    %74 = vmatpush.msra.mxu0 %v47
    %75 = vmatpush.msra.mxu0 %v46
    %76 = vmatpush.msra.mxu0 %v45
    %77 = vmatmul.f32.gmra.mxu0 %v44
    %v78 = vpop.f32.mrf.mxu0
    %v79 = vadd.f32 0.0, %v78
    %80 = vdwg.mxu0
    %vm81 = vcmp.ne.f32.partialorder %v79, %v79
    %v82 = vsel %vm81, 0.0, %v79
    %vm83 = vcmp.eq.f32.partialorder %v82, inf
    %v84 = vsel %vm83, 3.4028235e+38, %v82
    %vm85 = vcmp.eq.f32.partialorder %v84, -inf
    %v86 = vsel %vm85, -3.4028235e+38, %v84
    %87 = vst [vmem:[#allocation7] sm:$0xff] %v86
    // Predicated region
    $region18: #{tpu_custom_call.1} parent=1 // pred_check
      _
    $region19: #{tpu_custom_call.1} parent=1 // pred_check_branch
      %89 = sbr.rel (0) target = $region21
    $region20: #{tpu_custom_call.1} parent=1 // pred_region
      %91 = vsyncadd [#allocation4], 112
      %s92 = sshll.u32 [#allocation7], 4
      %s93 = int_to_ptr.vmem [resolvable:$true] %s92
      %s94 = sshll.u32 %s2, 4
      %s95 = int_to_ptr.hbm [resolvable:$true] %s94
      %100 = dma.vmem_to_hbm [thread:$0]  %s93, 16, %s95, [#allocation4], 16, 16, 1
    $region21: #{tpu_custom_call.1} parent=1 // pred_fallthru
      _
    // Predicated region
    $region22: #{tpu_custom_call.1} parent=1 // pred_check
      _
    $region23: #{tpu_custom_call.1} parent=1 // pred_check_branch
      %102 = sbr.rel (0) target = $region25
    $region24: #{tpu_custom_call.1} parent=1 // pred_region
      %104 = dma.done [#allocation4], 128
    $region25: #{tpu_custom_call.1} parent=1 // pred_fallthru
      _
    %105 = vsyncpa [#allocation3], 1
    %106 = vsyncpa [#allocation6], 1
    %107 = vsyncpa [#allocation4], 1

</llo_original>
